<compile_context>
chip_gen: v7x
topology: tpu7x:2x2x1
jax: 0.10.0
libtpu: 0.0.40
codegen_flags: <defaults>
</compile_context>

<pallas_src>
import functools
import math

import jax
import jax.numpy as jnp
from jax import lax
from jax.experimental import pallas as pl
from jax.experimental.pallas import tpu as pltpu

# Original module uses EMBED_SIZE = 384; shrunk here for a small, fast test.
EMBED_SIZE = 128
NUM_HEADS = 4
HEAD_SIZE = EMBED_SIZE // NUM_HEADS  # num_heads * head_size must equal EMBED_SIZE
SEQ_LEN = 8
BATCH = 2


# ---------------------------------------------------------------------------
# Fused kernel: per batch element, compute fused QKV projection for all heads,
# causal attention per head, concat heads lane-dense, then output projection.
# grid = (B,)
# ---------------------------------------------------------------------------
def mha_fused_kernel(x_ref, wqkv_ref, wp_ref, bp_ref, o_ref, *, num_heads):
    x = x_ref[...]                                   # (T, E)
    T, E = x.shape
    H = E // num_heads

    # One wide matmul for all of Q, K, V across all heads: (T, E) x (E, 3E).
    qkv = jnp.dot(x, wqkv_ref[...], preferred_element_type=jnp.float32)  # (T, 3E)

    # Divide by sqrt(C) with C = embedding size -- mirrors the PyTorch source.
    scale = jnp.float32(1.0 / math.sqrt(E))

    # Causal mask: built once, reused by every head.
    row = lax.broadcasted_iota(jnp.int32, (T, T), 0)
    col = lax.broadcasted_iota(jnp.int32, (T, T), 1)
    causal = col <= row
    neg = jnp.float32(-1e30)  # large finite negative: exp() -> 0, no NaN risk

    head_outs = []
    for h in range(num_heads):                       # static, unrolled (nh=4)
        qh = qkv[:, h * H:(h + 1) * H]               # (T, H)
        kh = qkv[:, E + h * H:E + (h + 1) * H]       # (T, H)
        vh = qkv[:, 2 * E + h * H:2 * E + (h + 1) * H]

        # q @ k^T without materializing a transpose: contract last axis of both.
        s = lax.dot_general(qh, kh, (((1,), (1,)), ((), ())),
                            preferred_element_type=jnp.float32) * scale  # (T, T)
        s = jnp.where(causal, s, neg)

        # Numerically-stable softmax over the key axis.
        m = jnp.max(s, axis=-1, keepdims=True)
        p = jnp.exp(s - m)
        inv = pl.reciprocal(jnp.sum(p, axis=-1, keepdims=True), approx=True)
        wei = p * inv
        # TODO(synk): training-mode dropout (pltpu.prng_*) not implemented.
        head_outs.append(jnp.dot(wei, vh, preferred_element_type=jnp.float32))

    cat = jnp.concatenate(head_outs, axis=-1)        # (T, E) -- lane-dense (128)
    y = jnp.dot(cat, wp_ref[...], preferred_element_type=jnp.float32) + bp_ref[...]
    o_ref[...] = y.astype(o_ref.dtype)


def multi_head_attention(x, wq, wk, wv, wp_t, bp):
    """x: (B,T,E); wq/wk/wv: (num_heads, E, head_size); wp_t: (E,E); bp: (1,E)."""
    B, T, E = x.shape
    nh, _, H = wq.shape

    # Pre-fuse weights once (host-side, outside the kernel) into one (E, 3E)
    # matrix: columns [0:E] = Q, [E:2E] = K, [2E:3E] = V; head h occupies
    # columns h*H:(h+1)*H inside each section.
    wq_cat = jnp.transpose(wq, (1, 0, 2)).reshape(E, nh * H)
    wk_cat = jnp.transpose(wk, (1, 0, 2)).reshape(E, nh * H)
    wv_cat = jnp.transpose(wv, (1, 0, 2)).reshape(E, nh * H)
    wqkv = jnp.concatenate([wq_cat, wk_cat, wv_cat], axis=-1)  # (E, 3E)

    kernel = functools.partial(mha_fused_kernel, num_heads=nh)

    out = pl.pallas_call(
        kernel,
        out_shape=jax.ShapeDtypeStruct((B, T, E), x.dtype),
        grid_spec=pltpu.PrefetchScalarGridSpec(
            num_scalar_prefetch=0,
            grid=(B,),
            in_specs=[
                pl.BlockSpec((None, T, E), lambda b: (b, 0, 0)),
                # constant index_maps -> weights stay resident in VMEM
                pl.BlockSpec((E, 3 * E), lambda b: (0, 0)),
                pl.BlockSpec((E, E), lambda b: (0, 0)),
                pl.BlockSpec((1, E), lambda b: (0, 0)),
            ],
            out_specs=pl.BlockSpec((None, T, E), lambda b: (b, 0, 0)),
        ),
        compiler_params=pltpu.CompilerParams(
            dimension_semantics=("parallel",)),
    )(x, wqkv, wp_t, bp)
    return out


def reference(x, wq, wk, wv, wp_t, bp):
    """Pure-JAX reference mirroring the PyTorch forward (eval mode)."""
    B, T, E = x.shape
    q = jnp.einsum("bte,hes->bhts", x, wq)
    k = jnp.einsum("bte,hes->bhts", x, wk)
    v = jnp.einsum("bte,hes->bhts", x, wv)
    wei = jnp.einsum("bhts,bhus->bhtu", q, k) / math.sqrt(E)
    mask = jnp.tril(jnp.ones((T, T), bool))
    wei = jnp.where(mask, wei, -jnp.inf)
    wei = jax.nn.softmax(wei, axis=-1)
    o = jnp.einsum("bhtu,bhus->bhts", wei, v)
    cat = jnp.transpose(o, (0, 2, 1, 3)).reshape(B, T, -1)
    return cat @ wp_t + bp


if __name__ == "__main__":
    key = jax.random.PRNGKey(0)
    kx, kq, kk, kv, kp, kb = jax.random.split(key, 6)

    x = jax.random.normal(kx, (BATCH, SEQ_LEN, EMBED_SIZE), jnp.float32)

    # Deterministic parameter init (PyTorch Linear weights are (out, in);
    # here they are stored pre-transposed so the kernel computes x @ W directly).
    scale = 1.0 / math.sqrt(EMBED_SIZE)
    wq = jax.random.uniform(kq, (NUM_HEADS, EMBED_SIZE, HEAD_SIZE), jnp.float32,
                            -scale, scale)
    wk = jax.random.uniform(kk, (NUM_HEADS, EMBED_SIZE, HEAD_SIZE), jnp.float32,
                            -scale, scale)
    wv = jax.random.uniform(kv, (NUM_HEADS, EMBED_SIZE, HEAD_SIZE), jnp.float32,
                            -scale, scale)
    wp_t = jax.random.uniform(kp, (EMBED_SIZE, EMBED_SIZE), jnp.float32,
                              -scale, scale)  # already transposed: (in, out)
    bp = jax.random.uniform(kb, (1, EMBED_SIZE), jnp.float32, -scale, scale)

    out = multi_head_attention(x, wq, wk, wv, wp_t, bp)
    out = jax.block_until_ready(out)

    ref = reference(x, wq, wk, wv, wp_t, bp)
    assert out.shape == (BATCH, SEQ_LEN, EMBED_SIZE)
    assert jnp.allclose(out, ref, rtol=2e-2, atol=2e-2), "mismatch vs reference"

    print("KERNEL_OK")
</pallas_src>

<mosaic_0001>
module attributes {stable_mosaic.version = 11 : i64} {
  func.func @mha_fused_kernel(%arg0: i32, %arg1: memref<1x8x128xf32, #tpu.memory_space<vmem>>, %arg2: memref<128x384xf32, #tpu.memory_space<vmem>>, %arg3: memref<128x128xf32, #tpu.memory_space<vmem>>, %arg4: memref<1x128xf32, #tpu.memory_space<vmem>>, %arg5: memref<1x8x128xf32, #tpu.memory_space<vmem>>) attributes {dimension_semantics = [#tpu.dimension_semantics<parallel>], iteration_bounds = array<i64: 2>, scalar_prefetch = 0 : i64, scratch_operands = 0 : i64, tpu.core_type = #tpu.core_type<tc>, window_params = [{transform_indices = @transform_0, window_bounds = array<i64: 1, 8, 128>}, {pipeline_mode = #tpu.pipeline_mode<synchronous>, transform_indices = @transform_1, window_bounds = array<i64: 128, 384>}, {pipeline_mode = #tpu.pipeline_mode<synchronous>, transform_indices = @transform_2, window_bounds = array<i64: 128, 128>}, {pipeline_mode = #tpu.pipeline_mode<synchronous>, transform_indices = @transform_3, window_bounds = array<i64: 1, 128>}, {transform_indices = @transform_4, window_bounds = array<i64: 1, 8, 128>}]} {
    %c0 = arith.constant 0 : index
    %c0_0 = arith.constant 0 : index
    %c0_1 = arith.constant 0 : index
    %0 = vector.load %arg1[%c0, %c0_0, %c0_1] : memref<1x8x128xf32, #tpu.memory_space<vmem>>, vector<1x8x128xf32>
    %1 = vector.shape_cast %0 : vector<1x8x128xf32> to vector<8x128xf32>
    %c0_2 = arith.constant 0 : index
    %c0_3 = arith.constant 0 : index
    %2 = vector.load %arg2[%c0_2, %c0_3] : memref<128x384xf32, #tpu.memory_space<vmem>>, vector<128x384xf32>
    %cst = arith.constant dense<0.000000e+00> : vector<8x384xf32>
    %3 = tpu.matmul %1, %2, %cst {dimension_numbers = #tpu.dot_dimension_numbers<[1], [0], [0], [1], [0, 0, 1, 1], [], []>} : vector<8x128xf32>, vector<128x384xf32>, vector<8x384xf32> -> vector<8x384xf32>
    %4 = tpu.iota {dimensions = array<i32: 0>} : vector<8x8xi32>
    %5 = tpu.iota {dimensions = array<i32: 1>} : vector<8x8xi32>
    %6 = arith.cmpi sle, %5, %4 : vector<8x8xi32>
    %7 = vector.extract_strided_slice %3 {offsets = [0, 0], sizes = [8, 32], strides = [1, 1]} : vector<8x384xf32> to vector<8x32xf32>
    %8 = vector.extract_strided_slice %3 {offsets = [0, 128], sizes = [8, 32], strides = [1, 1]} : vector<8x384xf32> to vector<8x32xf32>
    %9 = vector.extract_strided_slice %3 {offsets = [0, 256], sizes = [8, 32], strides = [1, 1]} : vector<8x384xf32> to vector<8x32xf32>
    %cst_4 = arith.constant dense<0.000000e+00> : vector<8x8xf32>
    %10 = tpu.matmul %7, %8, %cst_4 {dimension_numbers = #tpu.dot_dimension_numbers<[1], [1], [0], [0], [0, 0, 1, 0], [], []>} : vector<8x32xf32>, vector<8x32xf32>, vector<8x8xf32> -> vector<8x8xf32>
    %cst_5 = arith.constant 0.0883883461 : f32
    %11 = vector.broadcast %cst_5 : f32 to vector<8x8xf32>
    %12 = arith.mulf %10, %11 : vector<8x8xf32>
    %cst_6 = arith.constant -1.000000e+30 : f32
    %13 = vector.broadcast %cst_6 : f32 to vector<8x8xf32>
    %14 = arith.select %6, %12, %13 : vector<8x8xi1>, vector<8x8xf32>
    %cst_7 = arith.constant dense<0xFF800000> : vector<8xf32>
    %15 = vector.multi_reduction <maximumf>, %14, %cst_7 [1] : vector<8x8xf32> to vector<8xf32>
    %16 = vector.shape_cast %15 : vector<8xf32> to vector<8x1xf32>
    %17 = vector.broadcast %16 : vector<8x1xf32> to vector<8x8xf32>
    %18 = arith.subf %14, %17 : vector<8x8xf32>
    %19 = math.exp %18 : vector<8x8xf32>
    %cst_8 = arith.constant dense<0.000000e+00> : vector<8xf32>
    %20 = vector.multi_reduction <add>, %19, %cst_8 [1] : vector<8x8xf32> to vector<8xf32>
    %21 = vector.shape_cast %20 : vector<8xf32> to vector<8x1xf32>
    %22 = tpu.reciprocal %21 {approx = true} : vector<8x1xf32> -> vector<8x1xf32>
    %23 = vector.broadcast %22 : vector<8x1xf32> to vector<8x8xf32>
    %24 = arith.mulf %19, %23 : vector<8x8xf32>
    %cst_9 = arith.constant dense<0.000000e+00> : vector<8x32xf32>
    %25 = tpu.matmul %24, %9, %cst_9 {dimension_numbers = #tpu.dot_dimension_numbers<[1], [0], [0], [1], [0, 0, 1, 1], [], []>} : vector<8x8xf32>, vector<8x32xf32>, vector<8x32xf32> -> vector<8x32xf32>
    %26 = vector.extract_strided_slice %3 {offsets = [0, 32], sizes = [8, 32], strides = [1, 1]} : vector<8x384xf32> to vector<8x32xf32>
    %27 = vector.extract_strided_slice %3 {offsets = [0, 160], sizes = [8, 32], strides = [1, 1]} : vector<8x384xf32> to vector<8x32xf32>
    %28 = vector.extract_strided_slice %3 {offsets = [0, 288], sizes = [8, 32], strides = [1, 1]} : vector<8x384xf32> to vector<8x32xf32>
    %cst_10 = arith.constant dense<0.000000e+00> : vector<8x8xf32>
    %29 = tpu.matmul %26, %27, %cst_10 {dimension_numbers = #tpu.dot_dimension_numbers<[1], [1], [0], [0], [0, 0, 1, 0], [], []>} : vector<8x32xf32>, vector<8x32xf32>, vector<8x8xf32> -> vector<8x8xf32>
    %cst_11 = arith.constant 0.0883883461 : f32
    %30 = vector.broadcast %cst_11 : f32 to vector<8x8xf32>
    %31 = arith.mulf %29, %30 : vector<8x8xf32>
    %cst_12 = arith.constant -1.000000e+30 : f32
    %32 = vector.broadcast %cst_12 : f32 to vector<8x8xf32>
    %33 = arith.select %6, %31, %32 : vector<8x8xi1>, vector<8x8xf32>
    %cst_13 = arith.constant dense<0xFF800000> : vector<8xf32>
    %34 = vector.multi_reduction <maximumf>, %33, %cst_13 [1] : vector<8x8xf32> to vector<8xf32>
    %35 = vector.shape_cast %34 : vector<8xf32> to vector<8x1xf32>
    %36 = vector.broadcast %35 : vector<8x1xf32> to vector<8x8xf32>
    %37 = arith.subf %33, %36 : vector<8x8xf32>
    %38 = math.exp %37 : vector<8x8xf32>
    %cst_14 = arith.constant dense<0.000000e+00> : vector<8xf32>
    %39 = vector.multi_reduction <add>, %38, %cst_14 [1] : vector<8x8xf32> to vector<8xf32>
    %40 = vector.shape_cast %39 : vector<8xf32> to vector<8x1xf32>
    %41 = tpu.reciprocal %40 {approx = true} : vector<8x1xf32> -> vector<8x1xf32>
    %42 = vector.broadcast %41 : vector<8x1xf32> to vector<8x8xf32>
    %43 = arith.mulf %38, %42 : vector<8x8xf32>
    %cst_15 = arith.constant dense<0.000000e+00> : vector<8x32xf32>
    %44 = tpu.matmul %43, %28, %cst_15 {dimension_numbers = #tpu.dot_dimension_numbers<[1], [0], [0], [1], [0, 0, 1, 1], [], []>} : vector<8x8xf32>, vector<8x32xf32>, vector<8x32xf32> -> vector<8x32xf32>
    %45 = vector.extract_strided_slice %3 {offsets = [0, 64], sizes = [8, 32], strides = [1, 1]} : vector<8x384xf32> to vector<8x32xf32>
    %46 = vector.extract_strided_slice %3 {offsets = [0, 192], sizes = [8, 32], strides = [1, 1]} : vector<8x384xf32> to vector<8x32xf32>
    %47 = vector.extract_strided_slice %3 {offsets = [0, 320], sizes = [8, 32], strides = [1, 1]} : vector<8x384xf32> to vector<8x32xf32>
    %cst_16 = arith.constant dense<0.000000e+00> : vector<8x8xf32>
    %48 = tpu.matmul %45, %46, %cst_16 {dimension_numbers = #tpu.dot_dimension_numbers<[1], [1], [0], [0], [0, 0, 1, 0], [], []>} : vector<8x32xf32>, vector<8x32xf32>, vector<8x8xf32> -> vector<8x8xf32>
    %cst_17 = arith.constant 0.0883883461 : f32
    %49 = vector.broadcast %cst_17 : f32 to vector<8x8xf32>
    %50 = arith.mulf %48, %49 : vector<8x8xf32>
    %cst_18 = arith.constant -1.000000e+30 : f32
    %51 = vector.broadcast %cst_18 : f32 to vector<8x8xf32>
    %52 = arith.select %6, %50, %51 : vector<8x8xi1>, vector<8x8xf32>
    %cst_19 = arith.constant dense<0xFF800000> : vector<8xf32>
    %53 = vector.multi_reduction <maximumf>, %52, %cst_19 [1] : vector<8x8xf32> to vector<8xf32>
    %54 = vector.shape_cast %53 : vector<8xf32> to vector<8x1xf32>
    %55 = vector.broadcast %54 : vector<8x1xf32> to vector<8x8xf32>
    %56 = arith.subf %52, %55 : vector<8x8xf32>
    %57 = math.exp %56 : vector<8x8xf32>
    %cst_20 = arith.constant dense<0.000000e+00> : vector<8xf32>
    %58 = vector.multi_reduction <add>, %57, %cst_20 [1] : vector<8x8xf32> to vector<8xf32>
    %59 = vector.shape_cast %58 : vector<8xf32> to vector<8x1xf32>
    %60 = tpu.reciprocal %59 {approx = true} : vector<8x1xf32> -> vector<8x1xf32>
    %61 = vector.broadcast %60 : vector<8x1xf32> to vector<8x8xf32>
    %62 = arith.mulf %57, %61 : vector<8x8xf32>
    %cst_21 = arith.constant dense<0.000000e+00> : vector<8x32xf32>
    %63 = tpu.matmul %62, %47, %cst_21 {dimension_numbers = #tpu.dot_dimension_numbers<[1], [0], [0], [1], [0, 0, 1, 1], [], []>} : vector<8x8xf32>, vector<8x32xf32>, vector<8x32xf32> -> vector<8x32xf32>
    %64 = vector.extract_strided_slice %3 {offsets = [0, 96], sizes = [8, 32], strides = [1, 1]} : vector<8x384xf32> to vector<8x32xf32>
    %65 = vector.extract_strided_slice %3 {offsets = [0, 224], sizes = [8, 32], strides = [1, 1]} : vector<8x384xf32> to vector<8x32xf32>
    %66 = vector.extract_strided_slice %3 {offsets = [0, 352], sizes = [8, 32], strides = [1, 1]} : vector<8x384xf32> to vector<8x32xf32>
    %cst_22 = arith.constant dense<0.000000e+00> : vector<8x8xf32>
    %67 = tpu.matmul %64, %65, %cst_22 {dimension_numbers = #tpu.dot_dimension_numbers<[1], [1], [0], [0], [0, 0, 1, 0], [], []>} : vector<8x32xf32>, vector<8x32xf32>, vector<8x8xf32> -> vector<8x8xf32>
    %cst_23 = arith.constant 0.0883883461 : f32
    %68 = vector.broadcast %cst_23 : f32 to vector<8x8xf32>
    %69 = arith.mulf %67, %68 : vector<8x8xf32>
    %cst_24 = arith.constant -1.000000e+30 : f32
    %70 = vector.broadcast %cst_24 : f32 to vector<8x8xf32>
    %71 = arith.select %6, %69, %70 : vector<8x8xi1>, vector<8x8xf32>
    %cst_25 = arith.constant dense<0xFF800000> : vector<8xf32>
    %72 = vector.multi_reduction <maximumf>, %71, %cst_25 [1] : vector<8x8xf32> to vector<8xf32>
    %73 = vector.shape_cast %72 : vector<8xf32> to vector<8x1xf32>
    %74 = vector.broadcast %73 : vector<8x1xf32> to vector<8x8xf32>
    %75 = arith.subf %71, %74 : vector<8x8xf32>
    %76 = math.exp %75 : vector<8x8xf32>
    %cst_26 = arith.constant dense<0.000000e+00> : vector<8xf32>
    %77 = vector.multi_reduction <add>, %76, %cst_26 [1] : vector<8x8xf32> to vector<8xf32>
    %78 = vector.shape_cast %77 : vector<8xf32> to vector<8x1xf32>
    %79 = tpu.reciprocal %78 {approx = true} : vector<8x1xf32> -> vector<8x1xf32>
    %80 = vector.broadcast %79 : vector<8x1xf32> to vector<8x8xf32>
    %81 = arith.mulf %76, %80 : vector<8x8xf32>
    %cst_27 = arith.constant dense<0.000000e+00> : vector<8x32xf32>
    %82 = tpu.matmul %81, %66, %cst_27 {dimension_numbers = #tpu.dot_dimension_numbers<[1], [0], [0], [1], [0, 0, 1, 1], [], []>} : vector<8x8xf32>, vector<8x32xf32>, vector<8x32xf32> -> vector<8x32xf32>
    %83 = tpu.concatenate %25, %44, %63, %82 in 1 : vector<8x32xf32>, vector<8x32xf32>, vector<8x32xf32>, vector<8x32xf32> -> vector<8x128xf32>
    %c0_28 = arith.constant 0 : index
    %c0_29 = arith.constant 0 : index
    %84 = vector.load %arg3[%c0_28, %c0_29] : memref<128x128xf32, #tpu.memory_space<vmem>>, vector<128x128xf32>
    %cst_30 = arith.constant dense<0.000000e+00> : vector<8x128xf32>
    %85 = tpu.matmul %83, %84, %cst_30 {dimension_numbers = #tpu.dot_dimension_numbers<[1], [0], [0], [1], [0, 0, 1, 1], [], []>} : vector<8x128xf32>, vector<128x128xf32>, vector<8x128xf32> -> vector<8x128xf32>
    %c0_31 = arith.constant 0 : index
    %c0_32 = arith.constant 0 : index
    %86 = vector.load %arg4[%c0_31, %c0_32] : memref<1x128xf32, #tpu.memory_space<vmem>>, vector<1x128xf32>
    %87 = vector.broadcast %86 : vector<1x128xf32> to vector<8x128xf32>
    %88 = arith.addf %85, %87 : vector<8x128xf32>
    %c0_33 = arith.constant 0 : index
    %c0_34 = arith.constant 0 : index
    %c0_35 = arith.constant 0 : index
    %89 = vector.load %arg5[%c0_33, %c0_34, %c0_35] : memref<1x8x128xf32, #tpu.memory_space<vmem>>, vector<1x8x128xf32>
    %90 = vector.shape_cast %89 : vector<1x8x128xf32> to vector<8x128xf32>
    %91 = vector.shape_cast %88 : vector<8x128xf32> to vector<1x8x128xf32>
    tpu.vector_store %arg5[%c0_33, %c0_34, %c0_35], %91 {strides = array<i32>} : memref<1x8x128xf32, #tpu.memory_space<vmem>>, vector<1x8x128xf32>,
    return
  }
  func.func @transform_0(%arg0: i32) -> (i32, i32, i32) {
    %c0_i32 = arith.constant 0 : i32
    %c0_i32_0 = arith.constant 0 : i32
    %c0_i32_1 = arith.constant 0 : i32
    return %arg0, %c0_i32, %c0_i32_0 : i32, i32, i32
  }
  func.func @transform_1(%arg0: i32) -> (i32, i32) {
    %c0_i32 = arith.constant 0 : i32
    %c0_i32_0 = arith.constant 0 : i32
    %c0_i32_1 = arith.constant 0 : i32
    return %c0_i32, %c0_i32_0 : i32, i32
  }
  func.func @transform_2(%arg0: i32) -> (i32, i32) {
    %c0_i32 = arith.constant 0 : i32
    %c0_i32_0 = arith.constant 0 : i32
    %c0_i32_1 = arith.constant 0 : i32
    return %c0_i32, %c0_i32_0 : i32, i32
  }
  func.func @transform_3(%arg0: i32) -> (i32, i32) {
    %c0_i32 = arith.constant 0 : i32
    %c0_i32_0 = arith.constant 0 : i32
    %c0_i32_1 = arith.constant 0 : i32
    return %c0_i32, %c0_i32_0 : i32, i32
  }
  func.func @transform_4(%arg0: i32) -> (i32, i32, i32) {
    %c0_i32 = arith.constant 0 : i32
    %c0_i32_0 = arith.constant 0 : i32
    %c0_i32_1 = arith.constant 0 : i32
    return %arg0, %c0_i32, %c0_i32_0 : i32, i32, i32
  }
}

</mosaic_0001>

<llo_original>
// kernel: tpu_custom_call.1
$region0: #{tpu_custom_call.1}
  #allocation0 [shape = 'u32[]', space=smem, size = 0x4, offset = 0x4, fixed_abs, tag = 'smem constant byte address 0x4 - core index']
  #allocation1 [shape = 'u32[144,128]{1,0:T(1,128)}', space=vmem, size = 0x12000, scoped, tag = 'internal scratch']
  %s0 = inlined_call_operand.hbm [shape: f32[2,8,128], index: 0, kind: input, shape index: {}]
  %s1 = inlined_call_operand.hbm [shape: f32[128,384], index: 1, kind: input, shape index: {}]
  %s2 = inlined_call_operand.hbm [shape: f32[128,128], index: 2, kind: input, shape index: {}]
  %s3 = inlined_call_operand.vmem [shape: f32[1,128], index: 3, kind: input, shape index: {}]
  %s4 = inlined_call_operand.hbm [shape: f32[2,8,128], index: 4, kind: output, shape index: {}]
  %s5 = sld [smem:[#allocation0]]
  $region61: #{tpu_custom_call.1} parent=0
    _
  %s7 = ssub.s32 1, %s5
  %s8 = scalar_select 0, %s7, %s5
  $region1: #{tpu_custom_call.1} parent=0
    #allocation2 [shape = 'u8[8192]{0}', space=vmem, size = 0x2000, scoped, tag = 'input window, operand 0']
    #allocation3 [shape = 's32[2]{0}', space=sflag, size = 0x8, scoped, tag = 'scoped memory for tpu_custom_call.1']
    #allocation4 [shape = 's32[2]{0}', space=sflag, size = 0x8, scoped, tag = 'scoped memory for tpu_custom_call.1']
    #allocation5 [shape = 'u8[196608]{0}', space=vmem, size = 0x30000, scoped, tag = 'input window, operand 1, single buffered']
    #allocation6 [shape = 's32[1]{0}', space=sflag, size = 0x4, scoped, tag = 'scoped memory for tpu_custom_call.1']
    #allocation7 [shape = 'u8[65536]{0}', space=vmem, size = 0x10000, scoped, tag = 'input window, operand 2, single buffered']
    #allocation8 [shape = 'u8[8192]{0}', space=vmem, size = 0x2000, scoped, tag = 'output window, operand 0']
    %9 = vsyncpa [#allocation3], 0
    %s10 = scalar_lea.sflag [#allocation3], 1
    %11 = vsyncpa %s10, 0
    %12 = vsyncpa [#allocation6], 0
    %13 = vsyncpa [#allocation4], 0
    %s14 = scalar_lea.sflag [#allocation4], 1
    %15 = vsyncpa %s14, 0
    loop: start=0, step=1, limit=4
    $region2: #{tpu_custom_call.1} parent=1 // loop_pre_header
      _
    $region3: #{tpu_custom_call.1} parent=1 // loop_header
      %s17 = sphi 0, %s21
      %p18 = scmp.ge.s32.totalorder %s17, 4
      %s27 = sphi 0, %s29
      %s30 = sphi 0, %s27
      %s31 = sphi 0, %s30
      %s47 = sphi 0, %s31
      %s51 = sphi 0, %s51
      %s53 = sphi 0, %s51
      %s54 = sphi 0, %s53
      %s68 = sphi 0, %s54
      %s72 = sphi 0, %s72
      %s74 = sphi 0, %s72
      %s75 = sphi 0, %s74
      %s89 = sphi 0, %s75
      %s93 = sphi 0, %s93
      %s95 = sphi 0, %s93
      %s96 = sphi 0, %s95
      %s110 = sphi 0, %s96
      %s116 = sphi 0, %s118
      %s119 = sphi 0, %s116
      %s120 = sphi 0, %s119
      %s136 = sphi 0, %s120
    $region4: #{tpu_custom_call.1} parent=1 // loop_header_branch
      %20 = sbr.rel (%p18) target = $region8
    $region5: #{tpu_custom_call.1} parent=1 // loop_body
      %s22 = ssub.s32 %s17, 1
      %s23 = ssub.s32 %s17, 2
      %s24 = sadd.s32 %s17, 1
      %s25 = ssub.s32 %s17, %s24
      %p26 = scmp.eq.s32.totalorder %s25, 0
      %s28 = sadd.s32 %s27, 1
      %s29 = scalar_select %p26, %s27, %s28
      %p32 = pneg %p26
      %p33 = scmp.eq.s32.totalorder %s17, 1
      %p34 = por %p32, %p33
      %p35 = scmp.ne.s32.totalorder %s27, %s30
      %p36 = scmp.eq.s32.totalorder %s17, 0
      %p37 = por %p35, %p36
      %p38 = scmp.ne.s32.totalorder %s27, %s30
      %p39 = scmp.eq.s32.totalorder %s22, 1
      %p40 = por %p38, %p39
      %p41 = scmp.ne.s32.totalorder %s30, %s31
      %p42 = scmp.eq.s32.totalorder %s22, 0
      %p43 = por %p41, %p42
      %p44 = scmp.ne.s32.totalorder %s30, %s31
      %p45 = scmp.eq.s32.totalorder %s23, 1
      %p46 = por %p44, %p45
      %p48 = scmp.ne.s32.totalorder %s31, %s47
      %p49 = scmp.eq.s32.totalorder %s23, 0
      %p50 = por %p48, %p49
      %s52 = sadd.s32 %s51, 1
      %p55 = scmp.eq.s32.totalorder %s17, 1
      %p56 = scmp.ne.s32.totalorder %s51, %s53
      %p57 = scmp.eq.s32.totalorder %s17, 0
      %p58 = por %p56, %p57
      %p59 = scmp.ne.s32.totalorder %s51, %s53
      %p60 = scmp.eq.s32.totalorder %s22, 1
      %p61 = por %p59, %p60
      %p62 = scmp.ne.s32.totalorder %s53, %s54
      %p63 = scmp.eq.s32.totalorder %s22, 0
      %p64 = por %p62, %p63
      %p65 = scmp.ne.s32.totalorder %s53, %s54
      %p66 = scmp.eq.s32.totalorder %s23, 1
      %p67 = por %p65, %p66
      %p69 = scmp.ne.s32.totalorder %s54, %s68
      %p70 = scmp.eq.s32.totalorder %s23, 0
      %p71 = por %p69, %p70
      %s73 = sadd.s32 %s72, 1
      %p76 = scmp.eq.s32.totalorder %s17, 1
      %p77 = scmp.ne.s32.totalorder %s72, %s74
      %p78 = scmp.eq.s32.totalorder %s17, 0
      %p79 = por %p77, %p78
      %p80 = scmp.ne.s32.totalorder %s72, %s74
      %p81 = scmp.eq.s32.totalorder %s22, 1
      %p82 = por %p80, %p81
      %p83 = scmp.ne.s32.totalorder %s74, %s75
      %p84 = scmp.eq.s32.totalorder %s22, 0
      %p85 = por %p83, %p84
      %p86 = scmp.ne.s32.totalorder %s74, %s75
      %p87 = scmp.eq.s32.totalorder %s23, 1
      %p88 = por %p86, %p87
      %p90 = scmp.ne.s32.totalorder %s75, %s89
      %p91 = scmp.eq.s32.totalorder %s23, 0
      %p92 = por %p90, %p91
      %s94 = sadd.s32 %s93, 1
      %p97 = scmp.eq.s32.totalorder %s17, 1
      %p98 = scmp.ne.s32.totalorder %s93, %s95
      %p99 = scmp.eq.s32.totalorder %s17, 0
      %p100 = por %p98, %p99
      %p101 = scmp.ne.s32.totalorder %s93, %s95
      %p102 = scmp.eq.s32.totalorder %s22, 1
      %p103 = por %p101, %p102
      %p104 = scmp.ne.s32.totalorder %s95, %s96
      %p105 = scmp.eq.s32.totalorder %s22, 0
      %p106 = por %p104, %p105
      %p107 = scmp.ne.s32.totalorder %s95, %s96
      %p108 = scmp.eq.s32.totalorder %s23, 1
      %p109 = por %p107, %p108
      %p111 = scmp.ne.s32.totalorder %s96, %s110
      %p112 = scmp.eq.s32.totalorder %s23, 0
      %p113 = por %p111, %p112
      %s114 = ssub.s32 %s17, %s24
      %p115 = scmp.eq.s32.totalorder %s114, 0
      %s117 = sadd.s32 %s116, 1
      %s118 = scalar_select %p115, %s116, %s117
      %p121 = pneg %p115
      %p122 = scmp.eq.s32.totalorder %s17, 1
      %p123 = por %p121, %p122
      %p124 = scmp.ne.s32.totalorder %s116, %s119
      %p125 = scmp.eq.s32.totalorder %s17, 0
      %p126 = por %p124, %p125
      %p127 = scmp.ne.s32.totalorder %s116, %s119
      %p128 = scmp.eq.s32.totalorder %s22, 1
      %p129 = por %p127, %p128
      %p130 = scmp.ne.s32.totalorder %s119, %s120
      %p131 = scmp.eq.s32.totalorder %s22, 0
      %p132 = por %p130, %p131
      %p133 = scmp.ne.s32.totalorder %s119, %s120
      %p134 = scmp.eq.s32.totalorder %s23, 1
      %p135 = por %p133, %p134
      %p137 = scmp.ne.s32.totalorder %s120, %s136
      %p138 = scmp.eq.s32.totalorder %s23, 0
      %p139 = por %p137, %p138
      %p140 = scmp.le.s32.totalorder 1, %s17
      %p141 = scmp.lt.s32.totalorder %s17, 3
      %p142 = pnand %p140, %p141
      %p143 = pneg %p142
      // Predicated region
      $region9: #{tpu_custom_call.1} parent=5 // pred_check
        _
      $region10: #{tpu_custom_call.1} parent=5 // pred_check_branch
        %145 = sbr.rel (%p142) target = $region12
      $region11: #{tpu_custom_call.1} parent=5 // pred_region
        %s146 = ssub.s32 %s17, 1
        // Predicated region
        $region13: #{tpu_custom_call.1} parent=11 // pred_check
          %p147 = pneg %p64
        $region14: #{tpu_custom_call.1} parent=11 // pred_check_branch
          %149 = sbr.rel (%p147) target = $region16
        $region15: #{tpu_custom_call.1} parent=11 // pred_region
          %s151 = ssub.s32 6144, 6144
          %152 = vsyncadd [#allocation6], %s151
          %s153 = sshll.u32 [#allocation5], 4
          %s154 = int_to_ptr.vmem [resolvable:$true] %s153
          %159 = dma.hbm_to_vmem [thread:$0]  %s1, 6144, %s154, [#allocation6], 384, 384, 24
        $region16: #{tpu_custom_call.1} parent=11 // pred_fallthru
          _
        // Predicated region
        $region17: #{tpu_custom_call.1} parent=11 // pred_check
          %p160 = pneg %p85
        $region18: #{tpu_custom_call.1} parent=11 // pred_check_branch
          %162 = sbr.rel (%p160) target = $region20
        $region19: #{tpu_custom_call.1} parent=11 // pred_region
          %s164 = ssub.s32 2048, 2048
          %165 = vsyncadd [#allocation6], %s164
          %s166 = sshll.u32 [#allocation7], 4
          %s167 = int_to_ptr.vmem [resolvable:$true] %s166
          %172 = dma.hbm_to_vmem [thread:$0]  %s2, 2048, %s167, [#allocation6], 128, 128, 8
        $region20: #{tpu_custom_call.1} parent=11 // pred_fallthru
          _
        // Predicated region
        $region21: #{tpu_custom_call.1} parent=11 // pred_check
          %p173 = pneg %p106
        $region22: #{tpu_custom_call.1} parent=11 // pred_check_branch
          %175 = sbr.rel (%p173) target = $region24
        $region23: #{tpu_custom_call.1} parent=11 // pred_region
          _
        $region24: #{tpu_custom_call.1} parent=11 // pred_fallthru
          _
      $region12: #{tpu_custom_call.1} parent=5 // pred_fallthru
        _
      %p176 = scmp.lt.s32.totalorder %s17, 2
      // Predicated region
      $region25: #{tpu_custom_call.1} parent=5 // pred_check
        %p177 = pneg %p176
      $region26: #{tpu_custom_call.1} parent=5 // pred_check_branch
        %179 = sbr.rel (%p177) target = $region28
      $region27: #{tpu_custom_call.1} parent=5 // pred_region
        // Predicated region
        $region29: #{tpu_custom_call.1} parent=27 // pred_check
          %p180 = pneg %p37
        $region30: #{tpu_custom_call.1} parent=27 // pred_check_branch
          %182 = sbr.rel (%p180) target = $region32
        $region31: #{tpu_custom_call.1} parent=27 // pred_region
          %s183 = sand.u32 %s27, 1
          %s184 = scalar_lea.sflag [#allocation3], %s183
          %s185 = sand.u32 %s27, 1
          %s186 = smul.addr %s185, 8
          %s187 = scalar_lea.vmem [#allocation2], %s186
          %s189 = ssub.s32 128, 128
          %190 = vsyncadd %s184, %s189
          %s191 = smul.addr %s17, 128
          %s192 = scalar_lea.hbm %s0, %s191
          %s194 = sshll.u32 %s187, 4
          %s195 = int_to_ptr.vmem [resolvable:$true] %s194
          %197 = dma.hbm_to_vmem [thread:$0]  %s192, 128, %s195, %s184
        $region32: #{tpu_custom_call.1} parent=27 // pred_fallthru
          _
      $region28: #{tpu_custom_call.1} parent=5 // pred_fallthru
        _
      %p198 = scmp.le.s32.totalorder 1, %s17
      %p199 = scmp.lt.s32.totalorder %s17, 3
      %p200 = pnand %p198, %p199
      %p201 = pneg %p200
      // Predicated region
      $region33: #{tpu_custom_call.1} parent=5 // pred_check
        _
      $region34: #{tpu_custom_call.1} parent=5 // pred_check_branch
        %203 = sbr.rel (%p200) target = $region36
      $region35: #{tpu_custom_call.1} parent=5 // pred_region
        %s204 = ssub.s32 %s17, 1
        %s205 = sand.u32 %s30, 1
        %s206 = scalar_lea.sflag [#allocation3], %s205
        %s207 = sand.u32 %s30, 1
        %s208 = smul.addr %s207, 8
        %s209 = scalar_lea.vmem [#allocation2], %s208
        // Predicated region
        $region37: #{tpu_custom_call.1} parent=35 // pred_check
          %p210 = pneg %p43
        $region38: #{tpu_custom_call.1} parent=35 // pred_check_branch
          %212 = sbr.rel (%p210) target = $region40
        $region39: #{tpu_custom_call.1} parent=35 // pred_region
          %213 = dma.done %s206, 128
        $region40: #{tpu_custom_call.1} parent=35 // pred_fallthru
          _
        // Predicated region
        $region41: #{tpu_custom_call.1} parent=35 // pred_check
          %p214 = pneg %p64
        $region42: #{tpu_custom_call.1} parent=35 // pred_check_branch
          %216 = sbr.rel (%p214) target = $region44
        $region43: #{tpu_custom_call.1} parent=35 // pred_region
          %217 = dma.done [#allocation6], 6144
        $region44: #{tpu_custom_call.1} parent=35 // pred_fallthru
          _
        // Predicated region
        $region45: #{tpu_custom_call.1} parent=35 // pred_check
          %p218 = pneg %p85
        $region46: #{tpu_custom_call.1} parent=35 // pred_check_branch
          %220 = sbr.rel (%p218) target = $region48
        $region47: #{tpu_custom_call.1} parent=35 // pred_region
          %221 = dma.done [#allocation6], 2048
        $region48: #{tpu_custom_call.1} parent=35 // pred_fallthru
          _
        %s222 = sand.u32 %s30, 1
        %s223 = scalar_lea.sflag [#allocation3], %s222
        %s224 = sand.u32 %s30, 1
        %s225 = smul.addr %s224, 8
        %s226 = scalar_lea.vmem [#allocation2], %s225
        %p227 = pneg %p43
        %p228 = pneg %p40
        %p229 = pneg %p64
        %p230 = pneg %p61
        %p231 = pneg %p85
        %p232 = pneg %p82
        %p233 = pneg %p106
        %p234 = pneg %p103
        %p235 = pneg %p132
        %p236 = pneg %p129
        %s237 = sand.u32 %s119, 1
        %s238 = scalar_lea.sflag [#allocation4], %s237
        %s239 = sand.u32 %s119, 1
        %s240 = smul.addr %s239, 8
        %s241 = scalar_lea.vmem [#allocation8], %s240
        %v242 = vld [vmem:[%s209] sm:$0xff]
        %v243 = vld [vmem:[#allocation5] sm:$0xff]
        %v244 = vld [vmem:[#allocation5 + $0x8] sm:$0xff]
        %v245 = vld [vmem:[#allocation5 + $0x10] sm:$0xff]
        %v246 = vld [vmem:[#allocation5 + $0x18] sm:$0xff]
        %v247 = vld [vmem:[#allocation5 + $0x20] sm:$0xff]
        %v248 = vld [vmem:[#allocation5 + $0x28] sm:$0xff]
        %v249 = vld [vmem:[#allocation5 + $0x30] sm:$0xff]
        %v250 = vld [vmem:[#allocation5 + $0x38] sm:$0xff]
        %v251 = vld [vmem:[#allocation5 + $0x40] sm:$0xff]
        %v252 = vld [vmem:[#allocation5 + $0x48] sm:$0xff]
        %v253 = vld [vmem:[#allocation5 + $0x50] sm:$0xff]
        %v254 = vld [vmem:[#allocation5 + $0x58] sm:$0xff]
        %v255 = vld [vmem:[#allocation5 + $0x60] sm:$0xff]
        %v256 = vld [vmem:[#allocation5 + $0x68] sm:$0xff]
        %v257 = vld [vmem:[#allocation5 + $0x70] sm:$0xff]
        %v258 = vld [vmem:[#allocation5 + $0x78] sm:$0xff]
        %v259 = vld [vmem:[#allocation5 + $0x80] sm:$0xff]
        %v260 = vld [vmem:[#allocation5 + $0x88] sm:$0xff]
        %v261 = vld [vmem:[#allocation5 + $0x90] sm:$0xff]
        %v262 = vld [vmem:[#allocation5 + $0x98] sm:$0xff]
        %v263 = vld [vmem:[#allocation5 + $0xa0] sm:$0xff]
        %v264 = vld [vmem:[#allocation5 + $0xa8] sm:$0xff]
        %v265 = vld [vmem:[#allocation5 + $0xb0] sm:$0xff]
        %v266 = vld [vmem:[#allocation5 + $0xb8] sm:$0xff]
        %v267 = vld [vmem:[#allocation5 + $0xc0] sm:$0xff]
        %v268 = vld [vmem:[#allocation5 + $0xc8] sm:$0xff]
        %v269 = vld [vmem:[#allocation5 + $0xd0] sm:$0xff]
        %v270 = vld [vmem:[#allocation5 + $0xd8] sm:$0xff]
        %v271 = vld [vmem:[#allocation5 + $0xe0] sm:$0xff]
        %v272 = vld [vmem:[#allocation5 + $0xe8] sm:$0xff]
        %v273 = vld [vmem:[#allocation5 + $0xf0] sm:$0xff]
        %v274 = vld [vmem:[#allocation5 + $0xf8] sm:$0xff]
        %v275 = vld [vmem:[#allocation5 + $0x100] sm:$0xff]
        %v276 = vld [vmem:[#allocation5 + $0x108] sm:$0xff]
        %v277 = vld [vmem:[#allocation5 + $0x110] sm:$0xff]
        %v278 = vld [vmem:[#allocation5 + $0x118] sm:$0xff]
        %v279 = vld [vmem:[#allocation5 + $0x120] sm:$0xff]
        %v280 = vld [vmem:[#allocation5 + $0x128] sm:$0xff]
        %v281 = vld [vmem:[#allocation5 + $0x130] sm:$0xff]
        %v282 = vld [vmem:[#allocation5 + $0x138] sm:$0xff]
        %v283 = vld [vmem:[#allocation5 + $0x140] sm:$0xff]
        %v284 = vld [vmem:[#allocation5 + $0x148] sm:$0xff]
        %v285 = vld [vmem:[#allocation5 + $0x150] sm:$0xff]
        %v286 = vld [vmem:[#allocation5 + $0x158] sm:$0xff]
        %v287 = vld [vmem:[#allocation5 + $0x160] sm:$0xff]
        %v288 = vld [vmem:[#allocation5 + $0x168] sm:$0xff]
        %v289 = vld [vmem:[#allocation5 + $0x170] sm:$0xff]
        %v290 = vld [vmem:[#allocation5 + $0x178] sm:$0xff]
        %291 = vmatprep.subr.mxu0 %v244
        %292 = vmatpush1.msra.mxu0 %v243
        %293 = vmatprep.subr.mxu0 %v247
        %294 = vmatpush1.msra.mxu0 %v246
        %295 = vmatprep.subr.mxu0 %v250
        %296 = vmatpush1.msra.mxu0 %v249
        %297 = vmatprep.subr.mxu0 %v253
        %298 = vmatpush1.msra.mxu0 %v252
        %299 = vmatprep.subr.mxu0 %v256
        %300 = vmatpush1.msra.mxu0 %v255
        %301 = vmatprep.subr.mxu0 %v259
        %302 = vmatpush1.msra.mxu0 %v258
        %303 = vmatprep.subr.mxu0 %v262
        %304 = vmatpush1.msra.mxu0 %v261
        %305 = vmatprep.subr.mxu0 %v265
        %306 = vmatpush1.msra.mxu0 %v264
        %307 = vmatprep.subr.mxu0 %v268
        %308 = vmatpush1.msra.mxu0 %v267
        %309 = vmatprep.subr.mxu0 %v271
        %310 = vmatpush1.msra.mxu0 %v270
        %311 = vmatprep.subr.mxu0 %v274
        %312 = vmatpush1.msra.mxu0 %v273
        %313 = vmatprep.subr.mxu0 %v277
        %314 = vmatpush1.msra.mxu0 %v276
        %315 = vmatprep.subr.mxu0 %v280
        %316 = vmatpush1.msra.mxu0 %v279
        %317 = vmatprep.subr.mxu0 %v283
        %318 = vmatpush1.msra.mxu0 %v282
        %319 = vmatprep.subr.mxu0 %v286
        %320 = vmatpush1.msra.mxu0 %v285
        %321 = vmatprep.subr.mxu0 %v289
        %322 = vmatpush1.msra.mxu0 %v288
        %323 = vmatprep.subr.mxu0 0.0
        %324 = vmatpush1.msra.mxu0 0.0
        %325 = vmatprep.subr.mxu0 0.0
        %326 = vmatpush1.msra.mxu0 0.0
        %327 = vmatprep.subr.mxu0 0.0
        %328 = vmatpush1.msra.mxu0 0.0
        %329 = vmatprep.subr.mxu0 0.0
        %330 = vmatpush1.msra.mxu0 0.0
        %331 = vmatprep.subr.mxu0 0.0
        %332 = vmatpush1.msra.mxu0 0.0
        %333 = vmatprep.subr.mxu0 0.0
        %334 = vmatpush1.msra.mxu0 0.0
        %335 = vmatprep.subr.mxu0 0.0
        %336 = vmatpush1.msra.mxu0 0.0
        %337 = vmatprep.subr.mxu0 0.0
        %338 = vmatpush1.msra.mxu0 0.0
        %339 = vmatprep.subr.mxu0 0.0
        %340 = vmatpush1.msra.mxu0 0.0
        %341 = vmatprep.subr.mxu0 0.0
        %342 = vmatpush1.msra.mxu0 0.0
        %343 = vmatprep.subr.mxu0 0.0
        %344 = vmatpush1.msra.mxu0 0.0
        %345 = vmatprep.subr.mxu0 0.0
        %346 = vmatpush1.msra.mxu0 0.0
        %347 = vmatprep.subr.mxu0 0.0
        %348 = vmatpush1.msra.mxu0 0.0
        %349 = vmatprep.subr.mxu0 0.0
        %350 = vmatpush1.msra.mxu0 0.0
        %351 = vmatprep.subr.mxu0 0.0
        %352 = vmatpush1.msra.mxu0 0.0
        %353 = vmatprep.subr.mxu0 0.0
        %354 = vmatpush1.msra.mxu0 0.0
        %355 = vmatprep.mubr.f32.mxu0 0.0
        %356 = vmatmul.mubr.f32.gmra.mrb[0].mxu0 %v242
        %v357 = vpop.f32.mrb[0].mxu0
        %v358 = vadd.f32 0.0, %v357
        %v359 = vpop.f32.mrb[0].mxu0
        %v360 = vadd.f32 0.0, %v359
        %361 = vdwg.mxu0
        %362 = vmatprep.subr.mxu0 0.0
        %363 = vmatpush1.msra.mxu0 %v245
        %364 = vmatprep.subr.mxu0 0.0
        %365 = vmatpush1.msra.mxu0 %v248
        %366 = vmatprep.subr.mxu0 0.0
        %367 = vmatpush1.msra.mxu0 %v251
        %368 = vmatprep.subr.mxu0 0.0
        %369 = vmatpush1.msra.mxu0 %v254
        %370 = vmatprep.subr.mxu0 0.0
        %371 = vmatpush1.msra.mxu0 %v257
        %372 = vmatprep.subr.mxu0 0.0
        %373 = vmatpush1.msra.mxu0 %v260
        %374 = vmatprep.subr.mxu0 0.0
        %375 = vmatpush1.msra.mxu0 %v263
        %376 = vmatprep.subr.mxu0 0.0
        %377 = vmatpush1.msra.mxu0 %v266
        %378 = vmatprep.subr.mxu0 0.0
        %379 = vmatpush1.msra.mxu0 %v269
        %380 = vmatprep.subr.mxu0 0.0
        %381 = vmatpush1.msra.mxu0 %v272
        %382 = vmatprep.subr.mxu0 0.0
        %383 = vmatpush1.msra.mxu0 %v275
        %384 = vmatprep.subr.mxu0 0.0
        %385 = vmatpush1.msra.mxu0 %v278
        %386 = vmatprep.subr.mxu0 0.0
        %387 = vmatpush1.msra.mxu0 %v281
        %388 = vmatprep.subr.mxu0 0.0
        %389 = vmatpush1.msra.mxu0 %v284
        %390 = vmatprep.subr.mxu0 0.0
        %391 = vmatpush1.msra.mxu0 %v287
        %392 = vmatprep.subr.mxu0 0.0
        %393 = vmatpush1.msra.mxu0 %v290
        %394 = vmatprep.subr.mxu0 0.0
        %395 = vmatpush1.msra.mxu0 0.0
        %396 = vmatprep.subr.mxu0 0.0
        %397 = vmatpush1.msra.mxu0 0.0
        %398 = vmatprep.subr.mxu0 0.0
        %399 = vmatpush1.msra.mxu0 0.0
        %400 = vmatprep.subr.mxu0 0.0
        %401 = vmatpush1.msra.mxu0 0.0
        %402 = vmatprep.subr.mxu0 0.0
        %403 = vmatpush1.msra.mxu0 0.0
        %404 = vmatprep.subr.mxu0 0.0
        %405 = vmatpush1.msra.mxu0 0.0
        %406 = vmatprep.subr.mxu0 0.0
        %407 = vmatpush1.msra.mxu0 0.0
        %408 = vmatprep.subr.mxu0 0.0
        %409 = vmatpush1.msra.mxu0 0.0
        %410 = vmatprep.subr.mxu0 0.0
        %411 = vmatpush1.msra.mxu0 0.0
        %412 = vmatprep.subr.mxu0 0.0
        %413 = vmatpush1.msra.mxu0 0.0
        %414 = vmatprep.subr.mxu0 0.0
        %415 = vmatpush1.msra.mxu0 0.0
        %416 = vmatprep.subr.mxu0 0.0
        %417 = vmatpush1.msra.mxu0 0.0
        %418 = vmatprep.subr.mxu0 0.0
        %419 = vmatpush1.msra.mxu0 0.0
        %420 = vmatprep.subr.mxu0 0.0
        %421 = vmatpush1.msra.mxu0 0.0
        %422 = vmatprep.subr.mxu0 0.0
        %423 = vmatpush1.msra.mxu0 0.0
        %424 = vmatprep.subr.mxu0 0.0
        %425 = vmatpush1.msra.mxu0 0.0
        %426 = vmatprep.mubr.f32.mxu0 0.0
        %427 = vmatmul.mubr.f32.gmra.mrb[0].mxu0 %v242
        %v428 = vpop.f32.mrb[0].mxu0
        %v429 = vadd.f32 0.0, %v428
        %v430 = vpop.f32.mrb[0].mxu0
        %431 = vdwg.mxu0
        %v432 = vlaneseq
        %v433 = vshrl.u32 %v432, 7
        %v434 = vlaneseq
        %v435 = vand.u32 %v434, 127
        %vm436 = vcmp.le.s32.totalorder %v435, %v433
        %vm437 = vcmask 261120
        %v439 = vsel %vm437, %v358, 0
        %v442 = vsel %vm437, %v360, 0
        %444 = vmatprep.subr.mxu0 0.0
        %445 = vmatpush1.xpose.msra.mxu0 %v442
        %446 = vmatprep.subr.mxu0 0.0
        %447 = vmatpush1.xpose.msra.mxu0 0.0
        %448 = vmatprep.subr.mxu0 0.0
        %449 = vmatpush1.xpose.msra.mxu0 0.0
        %450 = vmatprep.subr.mxu0 0.0
        %451 = vmatpush1.xpose.msra.mxu0 0.0
        %452 = vmatprep.subr.mxu0 0.0
        %453 = vmatpush1.xpose.msra.mxu0 0.0
        %454 = vmatprep.subr.mxu0 0.0
        %455 = vmatpush1.xpose.msra.mxu0 0.0
        %456 = vmatprep.subr.mxu0 0.0
        %457 = vmatpush1.xpose.msra.mxu0 0.0
        %458 = vmatprep.subr.mxu0 0.0
        %459 = vmatpush1.xpose.msra.mxu0 0.0
        %460 = vmatprep.subr.mxu0 0.0
        %461 = vmatpush1.xpose.msra.mxu0 0.0
        %462 = vmatprep.subr.mxu0 0.0
        %463 = vmatpush1.xpose.msra.mxu0 0.0
        %464 = vmatprep.subr.mxu0 0.0
        %465 = vmatpush1.xpose.msra.mxu0 0.0
        %466 = vmatprep.subr.mxu0 0.0
        %467 = vmatpush1.xpose.msra.mxu0 0.0
        %468 = vmatprep.subr.mxu0 0.0
        %469 = vmatpush1.xpose.msra.mxu0 0.0
        %470 = vmatprep.subr.mxu0 0.0
        %471 = vmatpush1.xpose.msra.mxu0 0.0
        %472 = vmatprep.subr.mxu0 0.0
        %473 = vmatpush1.xpose.msra.mxu0 0.0
        %474 = vmatprep.subr.mxu0 0.0
        %475 = vmatpush1.xpose.msra.mxu0 0.0
        %476 = vmatprep.subr.mxu0 0.0
        %477 = vmatpush1.xpose.msra.mxu0 0.0
        %478 = vmatprep.subr.mxu0 0.0
        %479 = vmatpush1.xpose.msra.mxu0 0.0
        %480 = vmatprep.subr.mxu0 0.0
        %481 = vmatpush1.xpose.msra.mxu0 0.0
        %482 = vmatprep.subr.mxu0 0.0
        %483 = vmatpush1.xpose.msra.mxu0 0.0
        %484 = vmatprep.subr.mxu0 0.0
        %485 = vmatpush1.xpose.msra.mxu0 0.0
        %486 = vmatprep.subr.mxu0 0.0
        %487 = vmatpush1.xpose.msra.mxu0 0.0
        %488 = vmatprep.subr.mxu0 0.0
        %489 = vmatpush1.xpose.msra.mxu0 0.0
        %490 = vmatprep.subr.mxu0 0.0
        %491 = vmatpush1.xpose.msra.mxu0 0.0
        %492 = vmatprep.subr.mxu0 0.0
        %493 = vmatpush1.xpose.msra.mxu0 0.0
        %494 = vmatprep.subr.mxu0 0.0
        %495 = vmatpush1.xpose.msra.mxu0 0.0
        %496 = vmatprep.subr.mxu0 0.0
        %497 = vmatpush1.xpose.msra.mxu0 0.0
        %498 = vmatprep.subr.mxu0 0.0
        %499 = vmatpush1.xpose.msra.mxu0 0.0
        %500 = vmatprep.subr.mxu0 0.0
        %501 = vmatpush1.xpose.msra.mxu0 0.0
        %502 = vmatprep.subr.mxu0 0.0
        %503 = vmatpush1.xpose.msra.mxu0 0.0
        %504 = vmatprep.subr.mxu0 0.0
        %505 = vmatpush1.xpose.msra.mxu0 0.0
        %506 = vmatprep.subr.mxu0 0.0
        %507 = vmatpush1.xpose.msra.mxu0 0.0
        %508 = vmatprep.mubr.f32.mxu0 0.0
        %509 = vmatmul.mubr.f32.gmra.mrb[0].mxu0 %v439
        %v510 = vpop.f32.mrb[0].mxu0
        %v511 = vadd.f32 0.0, %v510
        %v512 = vpop.f32.mrb[0].mxu0
        %513 = vdwg.mxu0
        %v514 = vmul.f32 %v511, 0.088388346
        %v515 = vsel %vm436, %v514, -1e+30
        %vm516 = vcmask 64512
        %v517 = vsel %vm516, %v515, -inf
        %518 = vmax.xlane.f32.xlu0 %v517
        %v519 = vpop.xlane.xlu0 %518
        %v520 = vsub.f32 %v515, %v519
        %v521 = vmul.f32 %v520, 1.442695
        %v522 = vpow.pop %v521
        %v523 = vsel %vm516, %v522, 0.0
        %524 = vadd.xlane.f32.xlu0 %v523
        %v525 = vpop.xlane.xlu0 %524
        %v526 = vrcp.pop %v525
        %v527 = vmul.f32 %v522, %v526
        %v529 = vsel %vm516, %v527, 0
        %531 = vmatprep.subr.mxu0 0.0
        %532 = vmatpush1.msra.mxu0 %v429
        %533 = vmatprep.subr.mxu0 0.0
        %534 = vmatpush1.msra.mxu0 0.0
        %535 = vmatprep.subr.mxu0 0.0
        %536 = vmatpush1.msra.mxu0 0.0
        %537 = vmatprep.subr.mxu0 0.0
        %538 = vmatpush1.msra.mxu0 0.0
        %539 = vmatprep.subr.mxu0 0.0
        %540 = vmatpush1.msra.mxu0 0.0
        %541 = vmatprep.subr.mxu0 0.0
        %542 = vmatpush1.msra.mxu0 0.0
        %543 = vmatprep.subr.mxu0 0.0
        %544 = vmatpush1.msra.mxu0 0.0
        %545 = vmatprep.subr.mxu0 0.0
        %546 = vmatpush1.msra.mxu0 0.0
        %547 = vmatprep.subr.mxu0 0.0
        %548 = vmatpush1.msra.mxu0 0.0
        %549 = vmatprep.subr.mxu0 0.0
        %550 = vmatpush1.msra.mxu0 0.0
        %551 = vmatprep.subr.mxu0 0.0
        %552 = vmatpush1.msra.mxu0 0.0
        %553 = vmatprep.subr.mxu0 0.0
        %554 = vmatpush1.msra.mxu0 0.0
        %555 = vmatprep.subr.mxu0 0.0
        %556 = vmatpush1.msra.mxu0 0.0
        %557 = vmatprep.subr.mxu0 0.0
        %558 = vmatpush1.msra.mxu0 0.0
        %559 = vmatprep.subr.mxu0 0.0
        %560 = vmatpush1.msra.mxu0 0.0
        %561 = vmatprep.subr.mxu0 0.0
        %562 = vmatpush1.msra.mxu0 0.0
        %563 = vmatprep.subr.mxu0 0.0
        %564 = vmatpush1.msra.mxu0 0.0
        %565 = vmatprep.subr.mxu0 0.0
        %566 = vmatpush1.msra.mxu0 0.0
        %567 = vmatprep.subr.mxu0 0.0
        %568 = vmatpush1.msra.mxu0 0.0
        %569 = vmatprep.subr.mxu0 0.0
        %570 = vmatpush1.msra.mxu0 0.0
        %571 = vmatprep.subr.mxu0 0.0
        %572 = vmatpush1.msra.mxu0 0.0
        %573 = vmatprep.subr.mxu0 0.0
        %574 = vmatpush1.msra.mxu0 0.0
        %575 = vmatprep.subr.mxu0 0.0
        %576 = vmatpush1.msra.mxu0 0.0
        %577 = vmatprep.subr.mxu0 0.0
        %578 = vmatpush1.msra.mxu0 0.0
        %579 = vmatprep.subr.mxu0 0.0
        %580 = vmatpush1.msra.mxu0 0.0
        %581 = vmatprep.subr.mxu0 0.0
        %582 = vmatpush1.msra.mxu0 0.0
        %583 = vmatprep.subr.mxu0 0.0
        %584 = vmatpush1.msra.mxu0 0.0
        %585 = vmatprep.subr.mxu0 0.0
        %586 = vmatpush1.msra.mxu0 0.0
        %587 = vmatprep.subr.mxu0 0.0
        %588 = vmatpush1.msra.mxu0 0.0
        %589 = vmatprep.subr.mxu0 0.0
        %590 = vmatpush1.msra.mxu0 0.0
        %591 = vmatprep.subr.mxu0 0.0
        %592 = vmatpush1.msra.mxu0 0.0
        %593 = vmatprep.subr.mxu0 0.0
        %594 = vmatpush1.msra.mxu0 0.0
        %595 = vmatprep.mubr.f32.mxu0 0.0
        %596 = vmatmul.mubr.f32.gmra.mrb[0].mxu0 %v529
        %v597 = vpop.f32.mrb[0].mxu0
        %v598 = vadd.f32 0.0, %v597
        %v599 = vpop.f32.mrb[0].mxu0
        %600 = vdwg.mxu0
        %601 = vrot.lane.b32.xlu0 %v358, 96
        %v602 = vpop.permute.xlu0 %601
        %603 = vrot.lane.b32.xlu0 %v360, 96
        %v604 = vpop.permute.xlu0 %603
        %v605 = vsel %vm437, %v602, 0
        %v607 = vsel %vm437, %v604, 0
        %609 = vmatprep.subr.mxu0 0.0
        %610 = vmatpush1.xpose.msra.mxu0 %v607
        %611 = vmatprep.subr.mxu0 0.0
        %612 = vmatpush1.xpose.msra.mxu0 0.0
        %613 = vmatprep.subr.mxu0 0.0
        %614 = vmatpush1.xpose.msra.mxu0 0.0
        %615 = vmatprep.subr.mxu0 0.0
        %616 = vmatpush1.xpose.msra.mxu0 0.0
        %617 = vmatprep.subr.mxu0 0.0
        %618 = vmatpush1.xpose.msra.mxu0 0.0
        %619 = vmatprep.subr.mxu0 0.0
        %620 = vmatpush1.xpose.msra.mxu0 0.0
        %621 = vmatprep.subr.mxu0 0.0
        %622 = vmatpush1.xpose.msra.mxu0 0.0
        %623 = vmatprep.subr.mxu0 0.0
        %624 = vmatpush1.xpose.msra.mxu0 0.0
        %625 = vmatprep.subr.mxu0 0.0
        %626 = vmatpush1.xpose.msra.mxu0 0.0
        %627 = vmatprep.subr.mxu0 0.0
        %628 = vmatpush1.xpose.msra.mxu0 0.0
        %629 = vmatprep.subr.mxu0 0.0
        %630 = vmatpush1.xpose.msra.mxu0 0.0
        %631 = vmatprep.subr.mxu0 0.0
        %632 = vmatpush1.xpose.msra.mxu0 0.0
        %633 = vmatprep.subr.mxu0 0.0
        %634 = vmatpush1.xpose.msra.mxu0 0.0
        %635 = vmatprep.subr.mxu0 0.0
        %636 = vmatpush1.xpose.msra.mxu0 0.0
        %637 = vmatprep.subr.mxu0 0.0
        %638 = vmatpush1.xpose.msra.mxu0 0.0
        %639 = vmatprep.subr.mxu0 0.0
        %640 = vmatpush1.xpose.msra.mxu0 0.0
        %641 = vmatprep.subr.mxu0 0.0
        %642 = vmatpush1.xpose.msra.mxu0 0.0
        %643 = vmatprep.subr.mxu0 0.0
        %644 = vmatpush1.xpose.msra.mxu0 0.0
        %645 = vmatprep.subr.mxu0 0.0
        %646 = vmatpush1.xpose.msra.mxu0 0.0
        %647 = vmatprep.subr.mxu0 0.0
        %648 = vmatpush1.xpose.msra.mxu0 0.0
        %649 = vmatprep.subr.mxu0 0.0
        %650 = vmatpush1.xpose.msra.mxu0 0.0
        %651 = vmatprep.subr.mxu0 0.0
        %652 = vmatpush1.xpose.msra.mxu0 0.0
        %653 = vmatprep.subr.mxu0 0.0
        %654 = vmatpush1.xpose.msra.mxu0 0.0
        %655 = vmatprep.subr.mxu0 0.0
        %656 = vmatpush1.xpose.msra.mxu0 0.0
        %657 = vmatprep.subr.mxu0 0.0
        %658 = vmatpush1.xpose.msra.mxu0 0.0
        %659 = vmatprep.subr.mxu0 0.0
        %660 = vmatpush1.xpose.msra.mxu0 0.0
        %661 = vmatprep.subr.mxu0 0.0
        %662 = vmatpush1.xpose.msra.mxu0 0.0
        %663 = vmatprep.subr.mxu0 0.0
        %664 = vmatpush1.xpose.msra.mxu0 0.0
        %665 = vmatprep.subr.mxu0 0.0
        %666 = vmatpush1.xpose.msra.mxu0 0.0
        %667 = vmatprep.subr.mxu0 0.0
        %668 = vmatpush1.xpose.msra.mxu0 0.0
        %669 = vmatprep.subr.mxu0 0.0
        %670 = vmatpush1.xpose.msra.mxu0 0.0
        %671 = vmatprep.subr.mxu0 0.0
        %672 = vmatpush1.xpose.msra.mxu0 0.0
        %673 = vmatprep.mubr.f32.mxu0 0.0
        %674 = vmatmul.mubr.f32.gmra.mrb[0].mxu0 %v605
        %v675 = vpop.f32.mrb[0].mxu0
        %v676 = vadd.f32 0.0, %v675
        %v677 = vpop.f32.mrb[0].mxu0
        %678 = vdwg.mxu0
        %v679 = vmul.f32 %v676, 0.088388346
        %v680 = vsel %vm436, %v679, -1e+30
        %v681 = vsel %vm516, %v680, -inf
        %682 = vmax.xlane.f32.xlu0 %v681
        %v683 = vpop.xlane.xlu0 %682
        %v684 = vsub.f32 %v680, %v683
        %v685 = vmul.f32 %v684, 1.442695
        %v686 = vpow.pop %v685
        %v687 = vsel %vm516, %v686, 0.0
        %688 = vadd.xlane.f32.xlu0 %v687
        %v689 = vpop.xlane.xlu0 %688
        %v690 = vrcp.pop %v689
        %v691 = vmul.f32 %v686, %v690
        %693 = vrot.lane.b32.xlu0 %v429, 96
        %v694 = vpop.permute.xlu0 %693
        %v697 = vsel %vm516, %v691, 0
        %699 = vmatprep.subr.mxu0 0.0
        %700 = vmatpush1.msra.mxu0 %v694
        %701 = vmatprep.subr.mxu0 0.0
        %702 = vmatpush1.msra.mxu0 0.0
        %703 = vmatprep.subr.mxu0 0.0
        %704 = vmatpush1.msra.mxu0 0.0
        %705 = vmatprep.subr.mxu0 0.0
        %706 = vmatpush1.msra.mxu0 0.0
        %707 = vmatprep.subr.mxu0 0.0
        %708 = vmatpush1.msra.mxu0 0.0
        %709 = vmatprep.subr.mxu0 0.0
        %710 = vmatpush1.msra.mxu0 0.0
        %711 = vmatprep.subr.mxu0 0.0
        %712 = vmatpush1.msra.mxu0 0.0
        %713 = vmatprep.subr.mxu0 0.0
        %714 = vmatpush1.msra.mxu0 0.0
        %715 = vmatprep.subr.mxu0 0.0
        %716 = vmatpush1.msra.mxu0 0.0
        %717 = vmatprep.subr.mxu0 0.0
        %718 = vmatpush1.msra.mxu0 0.0
        %719 = vmatprep.subr.mxu0 0.0
        %720 = vmatpush1.msra.mxu0 0.0
        %721 = vmatprep.subr.mxu0 0.0
        %722 = vmatpush1.msra.mxu0 0.0
        %723 = vmatprep.subr.mxu0 0.0
        %724 = vmatpush1.msra.mxu0 0.0
        %725 = vmatprep.subr.mxu0 0.0
        %726 = vmatpush1.msra.mxu0 0.0
        %727 = vmatprep.subr.mxu0 0.0
        %728 = vmatpush1.msra.mxu0 0.0
        %729 = vmatprep.subr.mxu0 0.0
        %730 = vmatpush1.msra.mxu0 0.0
        %731 = vmatprep.subr.mxu0 0.0
        %732 = vmatpush1.msra.mxu0 0.0
        %733 = vmatprep.subr.mxu0 0.0
        %734 = vmatpush1.msra.mxu0 0.0
        %735 = vmatprep.subr.mxu0 0.0
        %736 = vmatpush1.msra.mxu0 0.0
        %737 = vmatprep.subr.mxu0 0.0
        %738 = vmatpush1.msra.mxu0 0.0
        %739 = vmatprep.subr.mxu0 0.0
        %740 = vmatpush1.msra.mxu0 0.0
        %741 = vmatprep.subr.mxu0 0.0
        %742 = vmatpush1.msra.mxu0 0.0
        %743 = vmatprep.subr.mxu0 0.0
        %744 = vmatpush1.msra.mxu0 0.0
        %745 = vmatprep.subr.mxu0 0.0
        %746 = vmatpush1.msra.mxu0 0.0
        %747 = vmatprep.subr.mxu0 0.0
        %748 = vmatpush1.msra.mxu0 0.0
        %749 = vmatprep.subr.mxu0 0.0
        %750 = vmatpush1.msra.mxu0 0.0
        %751 = vmatprep.subr.mxu0 0.0
        %752 = vmatpush1.msra.mxu0 0.0
        %753 = vmatprep.subr.mxu0 0.0
        %754 = vmatpush1.msra.mxu0 0.0
        %755 = vmatprep.subr.mxu0 0.0
        %756 = vmatpush1.msra.mxu0 0.0
        %757 = vmatprep.subr.mxu0 0.0
        %758 = vmatpush1.msra.mxu0 0.0
        %759 = vmatprep.subr.mxu0 0.0
        %760 = vmatpush1.msra.mxu0 0.0
        %761 = vmatprep.subr.mxu0 0.0
        %762 = vmatpush1.msra.mxu0 0.0
        %763 = vmatprep.mubr.f32.mxu0 0.0
        %764 = vmatmul.mubr.f32.gmra.mrb[0].mxu0 %v697
        %v765 = vpop.f32.mrb[0].mxu0
        %v766 = vadd.f32 0.0, %v765
        %v767 = vpop.f32.mrb[0].mxu0
        %768 = vdwg.mxu0
        %769 = vrot.lane.b32.xlu0 %v358, 64
        %v770 = vpop.permute.xlu0 %769
        %771 = vrot.lane.b32.xlu0 %v360, 64
        %v772 = vpop.permute.xlu0 %771
        %v773 = vsel %vm437, %v770, 0
        %v775 = vsel %vm437, %v772, 0
        %777 = vmatprep.subr.mxu0 0.0
        %778 = vmatpush1.xpose.msra.mxu0 %v775
        %779 = vmatprep.subr.mxu0 0.0
        %780 = vmatpush1.xpose.msra.mxu0 0.0
        %781 = vmatprep.subr.mxu0 0.0
        %782 = vmatpush1.xpose.msra.mxu0 0.0
        %783 = vmatprep.subr.mxu0 0.0
        %784 = vmatpush1.xpose.msra.mxu0 0.0
        %785 = vmatprep.subr.mxu0 0.0
        %786 = vmatpush1.xpose.msra.mxu0 0.0
        %787 = vmatprep.subr.mxu0 0.0
        %788 = vmatpush1.xpose.msra.mxu0 0.0
        %789 = vmatprep.subr.mxu0 0.0
        %790 = vmatpush1.xpose.msra.mxu0 0.0
        %791 = vmatprep.subr.mxu0 0.0
        %792 = vmatpush1.xpose.msra.mxu0 0.0
        %793 = vmatprep.subr.mxu0 0.0
        %794 = vmatpush1.xpose.msra.mxu0 0.0
        %795 = vmatprep.subr.mxu0 0.0
        %796 = vmatpush1.xpose.msra.mxu0 0.0
        %797 = vmatprep.subr.mxu0 0.0
        %798 = vmatpush1.xpose.msra.mxu0 0.0
        %799 = vmatprep.subr.mxu0 0.0
        %800 = vmatpush1.xpose.msra.mxu0 0.0
        %801 = vmatprep.subr.mxu0 0.0
        %802 = vmatpush1.xpose.msra.mxu0 0.0
        %803 = vmatprep.subr.mxu0 0.0
        %804 = vmatpush1.xpose.msra.mxu0 0.0
        %805 = vmatprep.subr.mxu0 0.0
        %806 = vmatpush1.xpose.msra.mxu0 0.0
        %807 = vmatprep.subr.mxu0 0.0
        %808 = vmatpush1.xpose.msra.mxu0 0.0
        %809 = vmatprep.subr.mxu0 0.0
        %810 = vmatpush1.xpose.msra.mxu0 0.0
        %811 = vmatprep.subr.mxu0 0.0
        %812 = vmatpush1.xpose.msra.mxu0 0.0
        %813 = vmatprep.subr.mxu0 0.0
        %814 = vmatpush1.xpose.msra.mxu0 0.0
        %815 = vmatprep.subr.mxu0 0.0
        %816 = vmatpush1.xpose.msra.mxu0 0.0
        %817 = vmatprep.subr.mxu0 0.0
        %818 = vmatpush1.xpose.msra.mxu0 0.0
        %819 = vmatprep.subr.mxu0 0.0
        %820 = vmatpush1.xpose.msra.mxu0 0.0
        %821 = vmatprep.subr.mxu0 0.0
        %822 = vmatpush1.xpose.msra.mxu0 0.0
        %823 = vmatprep.subr.mxu0 0.0
        %824 = vmatpush1.xpose.msra.mxu0 0.0
        %825 = vmatprep.subr.mxu0 0.0
        %826 = vmatpush1.xpose.msra.mxu0 0.0
        %827 = vmatprep.subr.mxu0 0.0
        %828 = vmatpush1.xpose.msra.mxu0 0.0
        %829 = vmatprep.subr.mxu0 0.0
        %830 = vmatpush1.xpose.msra.mxu0 0.0
        %831 = vmatprep.subr.mxu0 0.0
        %832 = vmatpush1.xpose.msra.mxu0 0.0
        %833 = vmatprep.subr.mxu0 0.0
        %834 = vmatpush1.xpose.msra.mxu0 0.0
        %835 = vmatprep.subr.mxu0 0.0
        %836 = vmatpush1.xpose.msra.mxu0 0.0
        %837 = vmatprep.subr.mxu0 0.0
        %838 = vmatpush1.xpose.msra.mxu0 0.0
        %839 = vmatprep.subr.mxu0 0.0
        %840 = vmatpush1.xpose.msra.mxu0 0.0
        %841 = vmatprep.mubr.f32.mxu0 0.0
        %842 = vmatmul.mubr.f32.gmra.mrb[0].mxu0 %v773
        %v843 = vpop.f32.mrb[0].mxu0
        %v844 = vadd.f32 0.0, %v843
        %v845 = vpop.f32.mrb[0].mxu0
        %846 = vdwg.mxu0
        %v847 = vmul.f32 %v844, 0.088388346
        %v848 = vsel %vm436, %v847, -1e+30
        %v849 = vsel %vm516, %v848, -inf
        %850 = vmax.xlane.f32.xlu0 %v849
        %v851 = vpop.xlane.xlu0 %850
        %v852 = vsub.f32 %v848, %v851
        %v853 = vmul.f32 %v852, 1.442695
        %v854 = vpow.pop %v853
        %v855 = vsel %vm516, %v854, 0.0
        %856 = vadd.xlane.f32.xlu0 %v855
        %v857 = vpop.xlane.xlu0 %856
        %v858 = vrcp.pop %v857
        %v859 = vmul.f32 %v854, %v858
        %860 = vrot.lane.b32.xlu0 %v429, 64
        %v861 = vpop.permute.xlu0 %860
        %v864 = vsel %vm516, %v859, 0
        %866 = vmatprep.subr.mxu0 0.0
        %867 = vmatpush1.msra.mxu0 %v861
        %868 = vmatprep.subr.mxu0 0.0
        %869 = vmatpush1.msra.mxu0 0.0
        %870 = vmatprep.subr.mxu0 0.0
        %871 = vmatpush1.msra.mxu0 0.0
        %872 = vmatprep.subr.mxu0 0.0
        %873 = vmatpush1.msra.mxu0 0.0
        %874 = vmatprep.subr.mxu0 0.0
        %875 = vmatpush1.msra.mxu0 0.0
        %876 = vmatprep.subr.mxu0 0.0
        %877 = vmatpush1.msra.mxu0 0.0
        %878 = vmatprep.subr.mxu0 0.0
        %879 = vmatpush1.msra.mxu0 0.0
        %880 = vmatprep.subr.mxu0 0.0
        %881 = vmatpush1.msra.mxu0 0.0
        %882 = vmatprep.subr.mxu0 0.0
        %883 = vmatpush1.msra.mxu0 0.0
        %884 = vmatprep.subr.mxu0 0.0
        %885 = vmatpush1.msra.mxu0 0.0
        %886 = vmatprep.subr.mxu0 0.0
        %887 = vmatpush1.msra.mxu0 0.0
        %888 = vmatprep.subr.mxu0 0.0
        %889 = vmatpush1.msra.mxu0 0.0
        %890 = vmatprep.subr.mxu0 0.0
        %891 = vmatpush1.msra.mxu0 0.0
        %892 = vmatprep.subr.mxu0 0.0
        %893 = vmatpush1.msra.mxu0 0.0
        %894 = vmatprep.subr.mxu0 0.0
        %895 = vmatpush1.msra.mxu0 0.0
        %896 = vmatprep.subr.mxu0 0.0
        %897 = vmatpush1.msra.mxu0 0.0
        %898 = vmatprep.subr.mxu0 0.0
        %899 = vmatpush1.msra.mxu0 0.0
        %900 = vmatprep.subr.mxu0 0.0
        %901 = vmatpush1.msra.mxu0 0.0
        %902 = vmatprep.subr.mxu0 0.0
        %903 = vmatpush1.msra.mxu0 0.0
        %904 = vmatprep.subr.mxu0 0.0
        %905 = vmatpush1.msra.mxu0 0.0
        %906 = vmatprep.subr.mxu0 0.0
        %907 = vmatpush1.msra.mxu0 0.0
        %908 = vmatprep.subr.mxu0 0.0
        %909 = vmatpush1.msra.mxu0 0.0
        %910 = vmatprep.subr.mxu0 0.0
        %911 = vmatpush1.msra.mxu0 0.0
        %912 = vmatprep.subr.mxu0 0.0
        %913 = vmatpush1.msra.mxu0 0.0
        %914 = vmatprep.subr.mxu0 0.0
        %915 = vmatpush1.msra.mxu0 0.0
        %916 = vmatprep.subr.mxu0 0.0
        %917 = vmatpush1.msra.mxu0 0.0
        %918 = vmatprep.subr.mxu0 0.0
        %919 = vmatpush1.msra.mxu0 0.0
        %920 = vmatprep.subr.mxu0 0.0
        %921 = vmatpush1.msra.mxu0 0.0
        %922 = vmatprep.subr.mxu0 0.0
        %923 = vmatpush1.msra.mxu0 0.0
        %924 = vmatprep.subr.mxu0 0.0
        %925 = vmatpush1.msra.mxu0 0.0
        %926 = vmatprep.subr.mxu0 0.0
        %927 = vmatpush1.msra.mxu0 0.0
        %928 = vmatprep.subr.mxu0 0.0
        %929 = vmatpush1.msra.mxu0 0.0
        %930 = vmatprep.mubr.f32.mxu0 0.0
        %931 = vmatmul.mubr.f32.gmra.mrb[0].mxu0 %v864
        %v932 = vpop.f32.mrb[0].mxu0
        %v933 = vadd.f32 0.0, %v932
        %v934 = vpop.f32.mrb[0].mxu0
        %935 = vdwg.mxu0
        %936 = vrot.lane.b32.xlu0 %v358, 32
        %v937 = vpop.permute.xlu0 %936
        %938 = vrot.lane.b32.xlu0 %v360, 32
        %v939 = vpop.permute.xlu0 %938
        %v940 = vsel %vm437, %v937, 0
        %v942 = vsel %vm437, %v939, 0
        %944 = vmatprep.subr.mxu0 0.0
        %945 = vmatpush1.xpose.msra.mxu0 %v942
        %946 = vmatprep.subr.mxu0 0.0
        %947 = vmatpush1.xpose.msra.mxu0 0.0
        %948 = vmatprep.subr.mxu0 0.0
        %949 = vmatpush1.xpose.msra.mxu0 0.0
        %950 = vmatprep.subr.mxu0 0.0
        %951 = vmatpush1.xpose.msra.mxu0 0.0
        %952 = vmatprep.subr.mxu0 0.0
        %953 = vmatpush1.xpose.msra.mxu0 0.0
        %954 = vmatprep.subr.mxu0 0.0
        %955 = vmatpush1.xpose.msra.mxu0 0.0
        %956 = vmatprep.subr.mxu0 0.0
        %957 = vmatpush1.xpose.msra.mxu0 0.0
        %958 = vmatprep.subr.mxu0 0.0
        %959 = vmatpush1.xpose.msra.mxu0 0.0
        %960 = vmatprep.subr.mxu0 0.0
        %961 = vmatpush1.xpose.msra.mxu0 0.0
        %962 = vmatprep.subr.mxu0 0.0
        %963 = vmatpush1.xpose.msra.mxu0 0.0
        %964 = vmatprep.subr.mxu0 0.0
        %965 = vmatpush1.xpose.msra.mxu0 0.0
        %966 = vmatprep.subr.mxu0 0.0
        %967 = vmatpush1.xpose.msra.mxu0 0.0
        %968 = vmatprep.subr.mxu0 0.0
        %969 = vmatpush1.xpose.msra.mxu0 0.0
        %970 = vmatprep.subr.mxu0 0.0
        %971 = vmatpush1.xpose.msra.mxu0 0.0
        %972 = vmatprep.subr.mxu0 0.0
        %973 = vmatpush1.xpose.msra.mxu0 0.0
        %974 = vmatprep.subr.mxu0 0.0
        %975 = vmatpush1.xpose.msra.mxu0 0.0
        %976 = vmatprep.subr.mxu0 0.0
        %977 = vmatpush1.xpose.msra.mxu0 0.0
        %978 = vmatprep.subr.mxu0 0.0
        %979 = vmatpush1.xpose.msra.mxu0 0.0
        %980 = vmatprep.subr.mxu0 0.0
        %981 = vmatpush1.xpose.msra.mxu0 0.0
        %982 = vmatprep.subr.mxu0 0.0
        %983 = vmatpush1.xpose.msra.mxu0 0.0
        %984 = vmatprep.subr.mxu0 0.0
        %985 = vmatpush1.xpose.msra.mxu0 0.0
        %986 = vmatprep.subr.mxu0 0.0
        %987 = vmatpush1.xpose.msra.mxu0 0.0
        %988 = vmatprep.subr.mxu0 0.0
        %989 = vmatpush1.xpose.msra.mxu0 0.0
        %990 = vmatprep.subr.mxu0 0.0
        %991 = vmatpush1.xpose.msra.mxu0 0.0
        %992 = vmatprep.subr.mxu0 0.0
        %993 = vmatpush1.xpose.msra.mxu0 0.0
        %994 = vmatprep.subr.mxu0 0.0
        %995 = vmatpush1.xpose.msra.mxu0 0.0
        %996 = vmatprep.subr.mxu0 0.0
        %997 = vmatpush1.xpose.msra.mxu0 0.0
        %998 = vmatprep.subr.mxu0 0.0
        %999 = vmatpush1.xpose.msra.mxu0 0.0
        %1000 = vmatprep.subr.mxu0 0.0
        %1001 = vmatpush1.xpose.msra.mxu0 0.0
        %1002 = vmatprep.subr.mxu0 0.0
        %1003 = vmatpush1.xpose.msra.mxu0 0.0
        %1004 = vmatprep.subr.mxu0 0.0
        %1005 = vmatpush1.xpose.msra.mxu0 0.0
        %1006 = vmatprep.subr.mxu0 0.0
        %1007 = vmatpush1.xpose.msra.mxu0 0.0
        %1008 = vmatprep.mubr.f32.mxu0 0.0
        %1009 = vmatmul.mubr.f32.gmra.mrb[0].mxu0 %v940
        %v1010 = vpop.f32.mrb[0].mxu0
        %v1011 = vadd.f32 0.0, %v1010
        %v1012 = vpop.f32.mrb[0].mxu0
        %1013 = vdwg.mxu0
        %v1014 = vmul.f32 %v1011, 0.088388346
        %v1015 = vsel %vm436, %v1014, -1e+30
        %v1016 = vsel %vm516, %v1015, -inf
        %1017 = vmax.xlane.f32.xlu0 %v1016
        %v1018 = vpop.xlane.xlu0 %1017
        %v1019 = vsub.f32 %v1015, %v1018
        %v1020 = vmul.f32 %v1019, 1.442695
        %v1021 = vpow.pop %v1020
        %v1022 = vsel %vm516, %v1021, 0.0
        %1023 = vadd.xlane.f32.xlu0 %v1022
        %v1024 = vpop.xlane.xlu0 %1023
        %v1025 = vrcp.pop %v1024
        %v1026 = vmul.f32 %v1021, %v1025
        %1027 = vrot.lane.b32.xlu0 %v429, 32
        %v1028 = vpop.permute.xlu0 %1027
        %v1031 = vsel %vm516, %v1026, 0
        %1033 = vmatprep.subr.mxu0 0.0
        %1034 = vmatpush1.msra.mxu0 %v1028
        %1035 = vmatprep.subr.mxu0 0.0
        %1036 = vmatpush1.msra.mxu0 0.0
        %1037 = vmatprep.subr.mxu0 0.0
        %1038 = vmatpush1.msra.mxu0 0.0
        %1039 = vmatprep.subr.mxu0 0.0
        %1040 = vmatpush1.msra.mxu0 0.0
        %1041 = vmatprep.subr.mxu0 0.0
        %1042 = vmatpush1.msra.mxu0 0.0
        %1043 = vmatprep.subr.mxu0 0.0
        %1044 = vmatpush1.msra.mxu0 0.0
        %1045 = vmatprep.subr.mxu0 0.0
        %1046 = vmatpush1.msra.mxu0 0.0
        %1047 = vmatprep.subr.mxu0 0.0
        %1048 = vmatpush1.msra.mxu0 0.0
        %1049 = vmatprep.subr.mxu0 0.0
        %1050 = vmatpush1.msra.mxu0 0.0
        %1051 = vmatprep.subr.mxu0 0.0
        %1052 = vmatpush1.msra.mxu0 0.0
        %1053 = vmatprep.subr.mxu0 0.0
        %1054 = vmatpush1.msra.mxu0 0.0
        %1055 = vmatprep.subr.mxu0 0.0
        %1056 = vmatpush1.msra.mxu0 0.0
        %1057 = vmatprep.subr.mxu0 0.0
        %1058 = vmatpush1.msra.mxu0 0.0
        %1059 = vmatprep.subr.mxu0 0.0
        %1060 = vmatpush1.msra.mxu0 0.0
        %1061 = vmatprep.subr.mxu0 0.0
        %1062 = vmatpush1.msra.mxu0 0.0
        %1063 = vmatprep.subr.mxu0 0.0
        %1064 = vmatpush1.msra.mxu0 0.0
        %1065 = vmatprep.subr.mxu0 0.0
        %1066 = vmatpush1.msra.mxu0 0.0
        %1067 = vmatprep.subr.mxu0 0.0
        %1068 = vmatpush1.msra.mxu0 0.0
        %1069 = vmatprep.subr.mxu0 0.0
        %1070 = vmatpush1.msra.mxu0 0.0
        %1071 = vmatprep.subr.mxu0 0.0
        %1072 = vmatpush1.msra.mxu0 0.0
        %1073 = vmatprep.subr.mxu0 0.0
        %1074 = vmatpush1.msra.mxu0 0.0
        %1075 = vmatprep.subr.mxu0 0.0
        %1076 = vmatpush1.msra.mxu0 0.0
        %1077 = vmatprep.subr.mxu0 0.0
        %1078 = vmatpush1.msra.mxu0 0.0
        %1079 = vmatprep.subr.mxu0 0.0
        %1080 = vmatpush1.msra.mxu0 0.0
        %1081 = vmatprep.subr.mxu0 0.0
        %1082 = vmatpush1.msra.mxu0 0.0
        %1083 = vmatprep.subr.mxu0 0.0
        %1084 = vmatpush1.msra.mxu0 0.0
        %1085 = vmatprep.subr.mxu0 0.0
        %1086 = vmatpush1.msra.mxu0 0.0
        %1087 = vmatprep.subr.mxu0 0.0
        %1088 = vmatpush1.msra.mxu0 0.0
        %1089 = vmatprep.subr.mxu0 0.0
        %1090 = vmatpush1.msra.mxu0 0.0
        %1091 = vmatprep.subr.mxu0 0.0
        %1092 = vmatpush1.msra.mxu0 0.0
        %1093 = vmatprep.subr.mxu0 0.0
        %1094 = vmatpush1.msra.mxu0 0.0
        %1095 = vmatprep.subr.mxu0 0.0
        %1096 = vmatpush1.msra.mxu0 0.0
        %1097 = vmatprep.mubr.f32.mxu0 0.0
        %1098 = vmatmul.mubr.f32.gmra.mrb[0].mxu0 %v1031
        %v1099 = vpop.f32.mrb[0].mxu0
        %v1100 = vadd.f32 0.0, %v1099
        %v1101 = vpop.f32.mrb[0].mxu0
        %1102 = vdwg.mxu0
        %1104 = vrot.lane.b32.xlu0 %v766, 32
        %v1105 = vpop.permute.xlu0 %1104
        %1108 = vrot.lane.b32.xlu0 %v933, 64
        %v1109 = vpop.permute.xlu0 %1108
        %1112 = vrot.lane.b32.xlu0 %v1100, 96
        %v1113 = vpop.permute.xlu0 %1112
        %v1115 = vsel %vm437, %v598, %v1105
        %vm1116 = vcmask 523264
        %v1117 = vsel %vm1116, %v1115, %v1109
        %vm1118 = vcmask 785408
        %v1119 = vsel %vm1118, %v1117, %v1113
        %v1120 = vld [vmem:[#allocation7] sm:$0xff]
        %v1121 = vld [vmem:[#allocation7 + $0x8] sm:$0xff]
        %v1122 = vld [vmem:[#allocation7 + $0x10] sm:$0xff]
        %v1123 = vld [vmem:[#allocation7 + $0x18] sm:$0xff]
        %v1124 = vld [vmem:[#allocation7 + $0x20] sm:$0xff]
        %v1125 = vld [vmem:[#allocation7 + $0x28] sm:$0xff]
        %v1126 = vld [vmem:[#allocation7 + $0x30] sm:$0xff]
        %v1127 = vld [vmem:[#allocation7 + $0x38] sm:$0xff]
        %v1128 = vld [vmem:[#allocation7 + $0x40] sm:$0xff]
        %v1129 = vld [vmem:[#allocation7 + $0x48] sm:$0xff]
        %v1130 = vld [vmem:[#allocation7 + $0x50] sm:$0xff]
        %v1131 = vld [vmem:[#allocation7 + $0x58] sm:$0xff]
        %v1132 = vld [vmem:[#allocation7 + $0x60] sm:$0xff]
        %v1133 = vld [vmem:[#allocation7 + $0x68] sm:$0xff]
        %v1134 = vld [vmem:[#allocation7 + $0x70] sm:$0xff]
        %v1135 = vld [vmem:[#allocation7 + $0x78] sm:$0xff]
        %v1136 = vld [vmem:[%s3] sm:$0x1]
        %v1138 = vlaneseq
        %v1139 = vshrl.u32 %v1138, 7
        %v1140 = vsub.s32 0, %v1139
        %v1141 = vrot.slane %v1136, %v1140
        %1143 = vmatprep.subr.mxu0 0.0
        %1144 = vmatpush1.msra.mxu0 %v1120
        %1145 = vmatprep.subr.mxu0 0.0
        %1146 = vmatpush1.msra.mxu0 %v1121
        %1147 = vmatprep.subr.mxu0 0.0
        %1148 = vmatpush1.msra.mxu0 %v1122
        %1149 = vmatprep.subr.mxu0 0.0
        %1150 = vmatpush1.msra.mxu0 %v1123
        %1151 = vmatprep.subr.mxu0 0.0
        %1152 = vmatpush1.msra.mxu0 %v1124
        %1153 = vmatprep.subr.mxu0 0.0
        %1154 = vmatpush1.msra.mxu0 %v1125
        %1155 = vmatprep.subr.mxu0 0.0
        %1156 = vmatpush1.msra.mxu0 %v1126
        %1157 = vmatprep.subr.mxu0 0.0
        %1158 = vmatpush1.msra.mxu0 %v1127
        %1159 = vmatprep.subr.mxu0 0.0
        %1160 = vmatpush1.msra.mxu0 %v1128
        %1161 = vmatprep.subr.mxu0 0.0
        %1162 = vmatpush1.msra.mxu0 %v1129
        %1163 = vmatprep.subr.mxu0 0.0
        %1164 = vmatpush1.msra.mxu0 %v1130
        %1165 = vmatprep.subr.mxu0 0.0
        %1166 = vmatpush1.msra.mxu0 %v1131
        %1167 = vmatprep.subr.mxu0 0.0
        %1168 = vmatpush1.msra.mxu0 %v1132
        %1169 = vmatprep.subr.mxu0 0.0
        %1170 = vmatpush1.msra.mxu0 %v1133
        %1171 = vmatprep.subr.mxu0 0.0
        %1172 = vmatpush1.msra.mxu0 %v1134
        %1173 = vmatprep.subr.mxu0 0.0
        %1174 = vmatpush1.msra.mxu0 %v1135
        %1175 = vmatprep.subr.mxu0 0.0
        %1176 = vmatpush1.msra.mxu0 0.0
        %1177 = vmatprep.subr.mxu0 0.0
        %1178 = vmatpush1.msra.mxu0 0.0
        %1179 = vmatprep.subr.mxu0 0.0
        %1180 = vmatpush1.msra.mxu0 0.0
        %1181 = vmatprep.subr.mxu0 0.0
        %1182 = vmatpush1.msra.mxu0 0.0
        %1183 = vmatprep.subr.mxu0 0.0
        %1184 = vmatpush1.msra.mxu0 0.0
        %1185 = vmatprep.subr.mxu0 0.0
        %1186 = vmatpush1.msra.mxu0 0.0
        %1187 = vmatprep.subr.mxu0 0.0
        %1188 = vmatpush1.msra.mxu0 0.0
        %1189 = vmatprep.subr.mxu0 0.0
        %1190 = vmatpush1.msra.mxu0 0.0
        %1191 = vmatprep.subr.mxu0 0.0
        %1192 = vmatpush1.msra.mxu0 0.0
        %1193 = vmatprep.subr.mxu0 0.0
        %1194 = vmatpush1.msra.mxu0 0.0
        %1195 = vmatprep.subr.mxu0 0.0
        %1196 = vmatpush1.msra.mxu0 0.0
        %1197 = vmatprep.subr.mxu0 0.0
        %1198 = vmatpush1.msra.mxu0 0.0
        %1199 = vmatprep.subr.mxu0 0.0
        %1200 = vmatpush1.msra.mxu0 0.0
        %1201 = vmatprep.subr.mxu0 0.0
        %1202 = vmatpush1.msra.mxu0 0.0
        %1203 = vmatprep.subr.mxu0 0.0
        %1204 = vmatpush1.msra.mxu0 0.0
        %1205 = vmatprep.subr.mxu0 0.0
        %1206 = vmatpush1.msra.mxu0 0.0
        %1207 = vmatprep.mubr.f32.mxu0 0.0
        %1208 = vmatmul.mubr.f32.gmra.mrb[0].mxu0 %v1119
        %v1209 = vpop.f32.mrb[0].mxu0
        %v1210 = vadd.f32 %v1141, %v1209
        %v1211 = vpop.f32.mrb[0].mxu0
        %1212 = vdwg.mxu0
        %1213 = vst [vmem:[%s241] sm:$0xff] %v1210
        %s1214 = sand.u32 %s119, 1
        %s1215 = scalar_lea.sflag [#allocation4], %s1214
        %s1216 = sand.u32 %s119, 1
        %s1217 = smul.addr %s1216, 8
        %s1218 = scalar_lea.vmem [#allocation8], %s1217
        // Predicated region
        $region49: #{tpu_custom_call.1} parent=35 // pred_check
          %p1219 = pneg %p129
        $region50: #{tpu_custom_call.1} parent=35 // pred_check_branch
          %1221 = sbr.rel (%p1219) target = $region52
        $region51: #{tpu_custom_call.1} parent=35 // pred_region
          %s1223 = ssub.s32 128, 128
          %1224 = vsyncadd %s1215, %s1223
          %s1225 = smul.addr %s22, 128
          %s1226 = scalar_lea.hbm %s4, %s1225
          %s1228 = sshll.u32 %s1218, 4
          %s1229 = int_to_ptr.vmem [resolvable:$true] %s1228
          %1231 = dma.vmem_to_hbm [thread:$0]  %s1229, 128, %s1226, %s1215
        $region52: #{tpu_custom_call.1} parent=35 // pred_fallthru
          _
      $region36: #{tpu_custom_call.1} parent=5 // pred_fallthru
        _
      %p1232 = scmp.le.s32.totalorder 2, %s17
      // Predicated region
      $region53: #{tpu_custom_call.1} parent=5 // pred_check
        %p1233 = pneg %p1232
      $region54: #{tpu_custom_call.1} parent=5 // pred_check_branch
        %1235 = sbr.rel (%p1233) target = $region56
      $region55: #{tpu_custom_call.1} parent=5 // pred_region
        %s1236 = ssub.s32 %s17, 2
        // Predicated region
        $region57: #{tpu_custom_call.1} parent=55 // pred_check
          %p1237 = pneg %p135
        $region58: #{tpu_custom_call.1} parent=55 // pred_check_branch
          %1239 = sbr.rel (%p1237) target = $region60
        $region59: #{tpu_custom_call.1} parent=55 // pred_region
          %s1240 = sand.u32 %s120, 1
          %s1241 = scalar_lea.sflag [#allocation4], %s1240
          %s1242 = sand.u32 %s120, 1
          %s1243 = smul.addr %s1242, 8
          %s1244 = scalar_lea.vmem [#allocation8], %s1243
          %1245 = dma.done %s1241, 128
        $region60: #{tpu_custom_call.1} parent=55 // pred_fallthru
          _
      $region56: #{tpu_custom_call.1} parent=5 // pred_fallthru
        _
    $region6: #{tpu_custom_call.1} parent=1 // loop_footer
      %s21 = sadd.s32 1, %s17
    $region7: #{tpu_custom_call.1} parent=1 // loop_footer_branch
      %16 = sbr.rel target = $region3
    $region8: #{tpu_custom_call.1} parent=1 // loop_exit
      _
    %1246 = vsyncpa [#allocation3], 1
    %s1247 = scalar_lea.sflag [#allocation3], 1
    %1248 = vsyncpa %s1247, 1
    %1249 = vsyncpa [#allocation6], 1
    %1250 = vsyncpa [#allocation4], 1
    %s1251 = scalar_lea.sflag [#allocation4], 1
    %1252 = vsyncpa %s1251, 1

</llo_original>
